<compile_context>
chip_gen: v5e
topology: v5e:2x2
jax: 0.10.0
libtpu: 0.0.40
codegen_flags: <defaults>
</compile_context>

<pallas_src>
import functools

import jax
import jax.numpy as jnp
from jax.experimental import pallas as pl
from jax.experimental.pallas import tpu as pltpu

HIDDEN_SIZE = 128


def _round_up(n, m):
    return ((n + m - 1) // m) * m


def actor_critic_kernel(x_ref, w1_ref, head_ref, out_ref, *,
                        state_dim, sd_pad, action_dim):
    x = x_ref[...]                                     # (tb, state_dim)

    # shared = ReLU(x @ W1 + b1); b1 lives in row `sd_pad` of the same blob.
    w1 = w1_ref[:state_dim, :]                         # (state_dim, HIDDEN)
    b1 = w1_ref[sd_pad:sd_pad + 1, :]                  # (1, HIDDEN)
    h = jnp.dot(x, w1, preferred_element_type=jnp.float32) + b1.astype(jnp.float32)
    h = jnp.maximum(h, 0.0)

    # fused heads: lanes [0:A) = actor logits, lane A = critic value, rest = 0.
    wh = head_ref[:HIDDEN_SIZE, :]                     # (HIDDEN, head_width)
    bh = head_ref[HIDDEN_SIZE:HIDDEN_SIZE + 1, :]      # (1, head_width)
    fused = jnp.dot(h.astype(wh.dtype), wh,
                    preferred_element_type=jnp.float32) + bh.astype(jnp.float32)

    # masked softmax over the actor lanes only (masked lanes -> exp(-inf) = 0).
    lane = jax.lax.broadcasted_iota(jnp.int32, fused.shape, 1)
    is_actor = lane < action_dim
    logits = jnp.where(is_actor, fused, -jnp.inf)
    m = jnp.max(logits, axis=-1, keepdims=True)
    e = jnp.exp(logits - m)
    denom = jnp.sum(e, axis=-1, keepdims=True)
    probs = e * pl.reciprocal(denom)                   # exact: probs sum to 1

    # outside the actor lanes keep `fused`: value stays in lane A, pad lanes 0.
    result = jnp.where(is_actor, probs, fused)

    # write back only the narrow slab (probs + value + a few zero pad lanes);
    # the masked partial store lands in the otherwise-idle store slot.
    out_ref[...] = result[:, : out_ref.shape[-1]].astype(out_ref.dtype)


def _choose_tiling(batch):
    """Returns (batch_tile, padded_batch)."""
    if batch < 16:
        # Tiny batch: single tile; block dims equal the full array dims.
        return batch, batch
    max_tile = 4096                       # a few hundred KiB double-buffered
    min_steps = 2 if batch < 64 else 4    # >=2 steps: v7x dual-TC + pipelining
    tb = min(max_tile, _round_up(pl.cdiv(batch, min_steps), 8))
    return tb, _round_up(batch, tb)


def actor_critic_forward(x, params):
    """Returns (probs (B, action_dim), value (B, 1)) — matches the PyTorch module."""
    w1b = params["w1b"]
    headb = params["headb"]
    state_dim = params["state_dim"]
    action_dim = params["action_dim"]
    sd_pad = params["sd_pad"]

    B = x.shape[0]
    assert x.shape[1] == state_dim
    head_width = headb.shape[1]
    out_w = _round_up(action_dim + 1, 8)
    x = x.astype(w1b.dtype)

    tb, b_pad = _choose_tiling(B)
    if b_pad != B:
        x = jnp.pad(x, ((0, b_pad - B), (0, 0)))
    grid = (b_pad // tb,)

    kernel = functools.partial(actor_critic_kernel, state_dim=state_dim,
                               sd_pad=sd_pad, action_dim=action_dim)

    itemsize = jnp.dtype(w1b.dtype).itemsize
    cost = pl.CostEstimate(
        flops=2 * b_pad * (state_dim * HIDDEN_SIZE + HIDDEN_SIZE * head_width),
        transcendentals=b_pad * head_width,
        bytes_accessed=(x.size * itemsize + w1b.size * itemsize
                        + headb.size * itemsize + b_pad * out_w * 4),
    )

    out = pl.pallas_call(
        kernel,
        out_shape=jax.ShapeDtypeStruct((b_pad, out_w), jnp.float32),
        grid_spec=pltpu.PrefetchScalarGridSpec(
            num_scalar_prefetch=0,
            grid=grid,
            in_specs=[
                pl.BlockSpec((tb, state_dim), lambda i: (i, 0)),
                pl.BlockSpec(w1b.shape, lambda i: (0, 0)),     # VMEM-resident
                pl.BlockSpec(headb.shape, lambda i: (0, 0)),   # VMEM-resident
            ],
            out_specs=pl.BlockSpec((tb, out_w), lambda i: (i, 0)),
        ),
        compiler_params=pltpu.CompilerParams(
            dimension_semantics=("parallel",),
            vmem_limit_bytes=32 * 1024 * 1024,
        ),
        cost_estimate=cost,
    )(x, w1b, headb)

    out = out[:B]
    probs = out[:, :action_dim]
    value = out[:, action_dim:action_dim + 1]
    return probs, value


def init_raw_params(key, state_dim, action_dim):
    """Mirror nn.Linear init: uniform(-1/sqrt(fan_in), +1/sqrt(fan_in)).
    Weights are stored transposed vs PyTorch, i.e. (in_features, out_features)."""
    ks = jax.random.split(key, 6)

    def lin(kw, kb, fan_in, fan_out):
        bound = 1.0 / (fan_in ** 0.5)
        w = jax.random.uniform(kw, (fan_in, fan_out), jnp.float32, -bound, bound)
        b = jax.random.uniform(kb, (fan_out,), jnp.float32, -bound, bound)
        return w, b

    w1, b1 = lin(ks[0], ks[1], state_dim, HIDDEN_SIZE)
    wa, ba = lin(ks[2], ks[3], HIDDEN_SIZE, action_dim)
    wc, bc = lin(ks[4], ks[5], HIDDEN_SIZE, 1)
    return w1, b1, wa, ba, wc, bc


def pack_params(w1, b1, wa, ba, wc, bc, dtype=jnp.bfloat16):
    """Pack the 6 nn.Linear tensors into 2 lane-dense blobs (so the kernel sees
    just 3 input refs including x).  Default bf16 (f32 accumulation in-kernel);
    pass dtype=jnp.float32 if exact f32 weights are required."""
    state_dim, hidden = w1.shape
    assert hidden == HIDDEN_SIZE
    action_dim = wa.shape[1]

    # shared-layer blob: W1 in rows [0:state_dim], b1 in row sd_pad
    # (16-aligned so the bias row sits on a packed-sublane tile boundary).
    sd_pad = _round_up(state_dim, 16)
    w1b = jnp.zeros((sd_pad + 16, HIDDEN_SIZE), jnp.float32)
    w1b = w1b.at[:state_dim, :].set(w1)
    w1b = w1b.at[sd_pad, :].set(b1)

    # fused-head blob: lanes [0:A) = Wa, lane A = Wc, bias row at row HIDDEN_SIZE.
    head_width = _round_up(action_dim + 1, 128)
    headb = jnp.zeros((HIDDEN_SIZE + 16, head_width), jnp.float32)
    headb = headb.at[:HIDDEN_SIZE, :action_dim].set(wa)
    headb = headb.at[:HIDDEN_SIZE, action_dim:action_dim + 1].set(wc)
    headb = headb.at[HIDDEN_SIZE, :action_dim].set(ba)
    headb = headb.at[HIDDEN_SIZE, action_dim].set(bc[0])

    return {
        "w1b": w1b.astype(dtype),
        "headb": headb.astype(dtype),
        "state_dim": state_dim,
        "action_dim": action_dim,
        "sd_pad": sd_pad,
    }


if __name__ == "__main__":
    key = jax.random.PRNGKey(0)
    k_x, k_p = jax.random.split(key)

    B, state_dim, action_dim = 2, 16, 4
    x = jax.random.normal(k_x, (B, state_dim), jnp.float32)
    raw = init_raw_params(k_p, state_dim, action_dim)
    params = pack_params(*raw)                      # bf16 by default

    probs, value = actor_critic_forward(x, params)
    jax.block_until_ready((probs, value))

    # pure-JAX f32 reference (same math as the PyTorch module)
    w1, b1, wa, ba, wc, bc = raw
    h = jnp.maximum(x @ w1 + b1, 0.0)
    ref_probs = jax.nn.softmax(h @ wa + ba, axis=-1)
    ref_value = h @ wc + bc

    assert probs.shape == (B, action_dim)
    assert value.shape == (B, 1)
    assert jnp.allclose(jnp.sum(probs, axis=-1), 1.0, atol=2e-3)
    # bf16 params/x -> slightly relaxed tolerance vs the f32 reference.
    assert jnp.allclose(probs, ref_probs, atol=2e-2)
    assert jnp.allclose(value, ref_value, atol=2e-2)

    print("KERNEL_OK")
</pallas_src>

<mosaic_0001>
module attributes {stable_mosaic.version = 11 : i64} {
  func.func @actor_critic_kernel(%arg0: i32, %arg1: memref<2x16xbf16, #tpu.memory_space<vmem>>, %arg2: memref<32x128xbf16, #tpu.memory_space<vmem>>, %arg3: memref<144x128xbf16, #tpu.memory_space<vmem>>, %arg4: memref<2x8xf32, #tpu.memory_space<vmem>>) attributes {dimension_semantics = [#tpu.dimension_semantics<parallel>], iteration_bounds = array<i64: 1>, scalar_prefetch = 0 : i64, scratch_operands = 0 : i64, tpu.core_type = #tpu.core_type<tc>, window_params = [{transform_indices = @transform_0, window_bounds = array<i64: 2, 16>}, {pipeline_mode = #tpu.pipeline_mode<synchronous>, transform_indices = @transform_1, window_bounds = array<i64: 32, 128>}, {pipeline_mode = #tpu.pipeline_mode<synchronous>, transform_indices = @transform_2, window_bounds = array<i64: 144, 128>}, {transform_indices = @transform_3, window_bounds = array<i64: 2, 8>}]} {
    %c0 = arith.constant 0 : index
    %c0_0 = arith.constant 0 : index
    %0 = vector.load %arg1[%c0, %c0_0] : memref<2x16xbf16, #tpu.memory_space<vmem>>, vector<2x16xbf16>
    %c0_1 = arith.constant 0 : index
    %c0_2 = arith.constant 0 : index
    %1 = vector.load %arg2[%c0_1, %c0_2] : memref<32x128xbf16, #tpu.memory_space<vmem>>, vector<16x128xbf16>
    %c16 = arith.constant 16 : index
    %c0_3 = arith.constant 0 : index
    %2 = vector.load %arg2[%c16, %c0_3] : memref<32x128xbf16, #tpu.memory_space<vmem>>, vector<1x128xbf16>
    %cst = arith.constant dense<0.000000e+00> : vector<2x128xf32>
    %3 = tpu.matmul %0, %1, %cst {dimension_numbers = #tpu.dot_dimension_numbers<[1], [0], [0], [1], [0, 0, 1, 1], [], []>} : vector<2x16xbf16>, vector<16x128xbf16>, vector<2x128xf32> -> vector<2x128xf32>
    %4 = arith.extf %2 : vector<1x128xbf16> to vector<1x128xf32>
    %5 = vector.broadcast %4 : vector<1x128xf32> to vector<2x128xf32>
    %6 = arith.addf %3, %5 : vector<2x128xf32>
    %cst_4 = arith.constant 0.000000e+00 : f32
    %7 = vector.broadcast %cst_4 : f32 to vector<2x128xf32>
    %8 = arith.maximumf %6, %7 : vector<2x128xf32>
    %c0_5 = arith.constant 0 : index
    %c0_6 = arith.constant 0 : index
    %9 = vector.load %arg3[%c0_5, %c0_6] : memref<144x128xbf16, #tpu.memory_space<vmem>>, vector<128x128xbf16>
    %c128 = arith.constant 128 : index
    %c0_7 = arith.constant 0 : index
    %10 = vector.load %arg3[%c128, %c0_7] : memref<144x128xbf16, #tpu.memory_space<vmem>>, vector<1x128xbf16>
    %11 = arith.truncf %8 : vector<2x128xf32> to vector<2x128xbf16>
    %cst_8 = arith.constant dense<0.000000e+00> : vector<2x128xf32>
    %12 = tpu.matmul %11, %9, %cst_8 {dimension_numbers = #tpu.dot_dimension_numbers<[1], [0], [0], [1], [0, 0, 1, 1], [], []>} : vector<2x128xbf16>, vector<128x128xbf16>, vector<2x128xf32> -> vector<2x128xf32>
    %13 = arith.extf %10 : vector<1x128xbf16> to vector<1x128xf32>
    %14 = vector.broadcast %13 : vector<1x128xf32> to vector<2x128xf32>
    %15 = arith.addf %12, %14 : vector<2x128xf32>
    %16 = tpu.iota {dimensions = array<i32: 1>} : vector<2x128xi32>
    %c4_i32 = arith.constant 4 : i32
    %17 = vector.broadcast %c4_i32 : i32 to vector<2x128xi32>
    %18 = arith.cmpi slt, %16, %17 : vector<2x128xi32>
    %cst_9 = arith.constant 0xFF800000 : f32
    %19 = vector.broadcast %cst_9 : f32 to vector<2x128xf32>
    %20 = arith.select %18, %15, %19 : vector<2x128xi1>, vector<2x128xf32>
    %cst_10 = arith.constant dense<0xFF800000> : vector<2xf32>
    %21 = vector.multi_reduction <maximumf>, %20, %cst_10 [1] : vector<2x128xf32> to vector<2xf32>
    %22 = vector.shape_cast %21 : vector<2xf32> to vector<2x1xf32>
    %23 = vector.broadcast %22 : vector<2x1xf32> to vector<2x128xf32>
    %24 = arith.subf %20, %23 : vector<2x128xf32>
    %25 = math.exp %24 : vector<2x128xf32>
    %cst_11 = arith.constant dense<0.000000e+00> : vector<2xf32>
    %26 = vector.multi_reduction <add>, %25, %cst_11 [1] : vector<2x128xf32> to vector<2xf32>
    %27 = vector.shape_cast %26 : vector<2xf32> to vector<2x1xf32>
    %28 = tpu.reciprocal %27 : vector<2x1xf32> -> vector<2x1xf32>
    %29 = vector.broadcast %28 : vector<2x1xf32> to vector<2x128xf32>
    %30 = arith.mulf %25, %29 : vector<2x128xf32>
    %31 = arith.select %18, %30, %15 : vector<2x128xi1>, vector<2x128xf32>
    %32 = vector.extract_strided_slice %31 {offsets = [0, 0], sizes = [2, 8], strides = [1, 1]} : vector<2x128xf32> to vector<2x8xf32>
    %c0_12 = arith.constant 0 : index
    %c0_13 = arith.constant 0 : index
    %33 = vector.load %arg4[%c0_12, %c0_13] : memref<2x8xf32, #tpu.memory_space<vmem>>, vector<2x8xf32>
    tpu.vector_store %arg4[%c0_12, %c0_13], %32 {strides = array<i32>} : memref<2x8xf32, #tpu.memory_space<vmem>>, vector<2x8xf32>,
    return
  }
  func.func @transform_0(%arg0: i32) -> (i32, i32) {
    %c0_i32 = arith.constant 0 : i32
    %c0_i32_0 = arith.constant 0 : i32
    return %arg0, %c0_i32 : i32, i32
  }
  func.func @transform_1(%arg0: i32) -> (i32, i32) {
    %c0_i32 = arith.constant 0 : i32
    %c0_i32_0 = arith.constant 0 : i32
    %c0_i32_1 = arith.constant 0 : i32
    return %c0_i32, %c0_i32_0 : i32, i32
  }
  func.func @transform_2(%arg0: i32) -> (i32, i32) {
    %c0_i32 = arith.constant 0 : i32
    %c0_i32_0 = arith.constant 0 : i32
    %c0_i32_1 = arith.constant 0 : i32
    return %c0_i32, %c0_i32_0 : i32, i32
  }
  func.func @transform_3(%arg0: i32) -> (i32, i32) {
    %c0_i32 = arith.constant 0 : i32
    %c0_i32_0 = arith.constant 0 : i32
    return %arg0, %c0_i32 : i32, i32
  }
}

</mosaic_0001>

<llo_original>
// kernel: tpu_custom_call.1
$region0: #{tpu_custom_call.1}
  #allocation0 [shape = 'u32[]', space=smem, size = 0x4, offset = 0x4, fixed_abs, tag = 'smem constant byte address 0x4 - core index']
  #allocation1 [shape = 'u32[72,128]{1,0:T(1,128)}', space=vmem, size = 0x9000, scoped, tag = 'internal scratch']
  %s0 = inlined_call_operand.hbm [shape: bf16[2,16], index: 0, kind: input, shape index: {}]
  %s1 = inlined_call_operand.hbm [shape: bf16[32,128], index: 1, kind: input, shape index: {}]
  %s2 = inlined_call_operand.hbm [shape: bf16[144,128], index: 2, kind: input, shape index: {}]
  %s3 = inlined_call_operand.hbm [shape: f32[2,8], index: 3, kind: output, shape index: {}]
  %s4 = sld [smem:[#allocation0]]
  $region34: #{tpu_custom_call.1} parent=0
    _
  %s6 = ssub.s32 1, %s4
  %s7 = scalar_select 0, %s6, %s4
  $region1: #{tpu_custom_call.1} parent=0
    #allocation2 [shape = 'u8[512]{0}', space=vmem, size = 0x400, scoped, tag = 'input window, operand 0, single buffered']
    #allocation3 [shape = 's32[1]{0}', space=sflag, size = 0x4, scoped, tag = 'scoped memory for tpu_custom_call.1']
    #allocation4 [shape = 's32[1]{0}', space=sflag, size = 0x4, scoped, tag = 'scoped memory for tpu_custom_call.1']
    #allocation5 [shape = 'u8[8192]{0}', space=vmem, size = 0x2000, scoped, tag = 'input window, operand 1, single buffered']
    #allocation6 [shape = 's32[1]{0}', space=sflag, size = 0x4, scoped, tag = 'scoped memory for tpu_custom_call.1']
    #allocation7 [shape = 'u8[36864]{0}', space=vmem, size = 0x9000, scoped, tag = 'input window, operand 2, single buffered']
    #allocation8 [shape = 'u8[1024]{0}', space=vmem, size = 0x400, scoped, tag = 'output window, operand 0, single buffered']
    %8 = vsyncpa [#allocation3], 0
    %9 = vsyncpa [#allocation6], 0
    %10 = vsyncpa [#allocation4], 0
    // Predicated region
    $region2: #{tpu_custom_call.1} parent=1 // pred_check
      _
    $region3: #{tpu_custom_call.1} parent=1 // pred_check_branch
      %12 = sbr.rel (0) target = $region5
    $region4: #{tpu_custom_call.1} parent=1 // pred_region
      %14 = vsyncadd [#allocation3], 0
      %s16 = sshll.u32 %s0, 4
      %s17 = int_to_ptr.hbm [resolvable:$true] %s16
      %s18 = sshll.u32 [#allocation2], 4
      %s19 = int_to_ptr.vmem [resolvable:$true] %s18
      %21 = dma.hbm_to_vmem [thread:$0]  %s17, 16, %s19, [#allocation3]
    $region5: #{tpu_custom_call.1} parent=1 // pred_fallthru
      _
    // Predicated region
    $region6: #{tpu_custom_call.1} parent=1 // pred_check
      _
    $region7: #{tpu_custom_call.1} parent=1 // pred_check_branch
      %23 = sbr.rel (0) target = $region9
    $region8: #{tpu_custom_call.1} parent=1 // pred_region
      %25 = vsyncadd [#allocation6], 0
      %s26 = sshll.u32 %s1, 4
      %s27 = int_to_ptr.hbm [resolvable:$true] %s26
      %s28 = sshll.u32 [#allocation5], 4
      %s29 = int_to_ptr.vmem [resolvable:$true] %s28
      %34 = dma.hbm_to_vmem [thread:$0]  %s27, 256, %s29, [#allocation6], 64, 64, 4
    $region9: #{tpu_custom_call.1} parent=1 // pred_fallthru
      _
    // Predicated region
    $region10: #{tpu_custom_call.1} parent=1 // pred_check
      _
    $region11: #{tpu_custom_call.1} parent=1 // pred_check_branch
      %36 = sbr.rel (0) target = $region13
    $region12: #{tpu_custom_call.1} parent=1 // pred_region
      %38 = vsyncadd [#allocation6], 0
      %s39 = sshll.u32 %s2, 4
      %s40 = int_to_ptr.hbm [resolvable:$true] %s39
      %s41 = sshll.u32 [#allocation7], 4
      %s42 = int_to_ptr.vmem [resolvable:$true] %s41
      %47 = dma.hbm_to_vmem [thread:$0]  %s40, 1152, %s42, [#allocation6], 64, 64, 4
    $region13: #{tpu_custom_call.1} parent=1 // pred_fallthru
      _
    // Predicated region
    $region14: #{tpu_custom_call.1} parent=1 // pred_check
      _
    $region15: #{tpu_custom_call.1} parent=1 // pred_check_branch
      %49 = sbr.rel (0) target = $region17
    $region16: #{tpu_custom_call.1} parent=1 // pred_region
      %51 = dma.done [#allocation3], 16
    $region17: #{tpu_custom_call.1} parent=1 // pred_fallthru
      _
    // Predicated region
    $region18: #{tpu_custom_call.1} parent=1 // pred_check
      _
    $region19: #{tpu_custom_call.1} parent=1 // pred_check_branch
      %53 = sbr.rel (0) target = $region21
    $region20: #{tpu_custom_call.1} parent=1 // pred_region
      %55 = dma.done [#allocation6], 256
    $region21: #{tpu_custom_call.1} parent=1 // pred_fallthru
      _
    // Predicated region
    $region22: #{tpu_custom_call.1} parent=1 // pred_check
      _
    $region23: #{tpu_custom_call.1} parent=1 // pred_check_branch
      %57 = sbr.rel (0) target = $region25
    $region24: #{tpu_custom_call.1} parent=1 // pred_region
      %59 = dma.done [#allocation6], 1152
    $region25: #{tpu_custom_call.1} parent=1 // pred_fallthru
      _
    %v61 = vld [vmem:[#allocation2] sm:$0x1]
    %v62 = vld [vmem:[#allocation5] sm:$0xf]
    %v63 = vld [vmem:[#allocation5 + $0x4] sm:$0xf]
    %v64 = vld [vmem:[#allocation5 + $0x8] sm:$0x1]
    %v65 = vunpack.c.l.bf16 %v64
    %v66 = vperm.slane %v65, 0
    %v69 = vunpack.c.l.b16 %v62
    %v70 = vunpack.c.l.b16 %v63
    %v71 = vpack.c.b16 %v70, %v69
    %vm73 = vcmask 130048
    %v75 = vsel %vm73, %v61, 0
    %77 = vmatpush.bf16.msra.mxu0 0
    %78 = vmatpush.bf16.msra.mxu0 0
    %79 = vmatpush.bf16.msra.mxu0 0
    %80 = vmatpush.bf16.msra.mxu0 0
    %81 = vmatpush.bf16.msra.mxu0 0
    %82 = vmatpush.bf16.msra.mxu0 0
    %83 = vmatpush.bf16.msra.mxu0 0
    %84 = vmatpush.bf16.msra.mxu0 %v71
    %85 = vmatmul.bf16.gmra.mxu0 %v75
    %v86 = vpop.f32.mrf.mxu0
    %v87 = vadd.f32 %v66, %v86
    %v88 = vpop.f32.mrf.mxu0
    %89 = vdwg.mxu0
    %v90 = vmax.f32 %v87, 0.0
    %v91 = vld [vmem:[#allocation7] sm:$0xf]
    %v92 = vld [vmem:[#allocation7 + $0x4] sm:$0xf]
    %v93 = vld [vmem:[#allocation7 + $0x8] sm:$0xf]
    %v94 = vld [vmem:[#allocation7 + $0xc] sm:$0xf]
    %v95 = vld [vmem:[#allocation7 + $0x10] sm:$0xf]
    %v96 = vld [vmem:[#allocation7 + $0x14] sm:$0xf]
    %v97 = vld [vmem:[#allocation7 + $0x18] sm:$0xf]
    %v98 = vld [vmem:[#allocation7 + $0x1c] sm:$0xf]
    %v99 = vld [vmem:[#allocation7 + $0x20] sm:$0xf]
    %v100 = vld [vmem:[#allocation7 + $0x24] sm:$0xf]
    %v101 = vld [vmem:[#allocation7 + $0x28] sm:$0xf]
    %v102 = vld [vmem:[#allocation7 + $0x2c] sm:$0xf]
    %v103 = vld [vmem:[#allocation7 + $0x30] sm:$0xf]
    %v104 = vld [vmem:[#allocation7 + $0x34] sm:$0xf]
    %v105 = vld [vmem:[#allocation7 + $0x38] sm:$0xf]
    %v106 = vld [vmem:[#allocation7 + $0x3c] sm:$0xf]
    %v107 = vld [vmem:[#allocation7 + $0x40] sm:$0x1]
    %v108 = vpack.c.bf16 %v90, %v90
    %v109 = vunpack.c.l.bf16 %v107
    %v110 = vperm.slane %v109, 0
    %v127 = vunpack.c.l.b16 %v91
    %v128 = vunpack.c.l.b16 %v92
    %v129 = vunpack.c.l.b16 %v93
    %v130 = vunpack.c.l.b16 %v94
    %v131 = vunpack.c.l.b16 %v95
    %v132 = vunpack.c.l.b16 %v96
    %v133 = vunpack.c.l.b16 %v97
    %v134 = vunpack.c.l.b16 %v98
    %v135 = vunpack.c.l.b16 %v99
    %v136 = vunpack.c.l.b16 %v100
    %v137 = vunpack.c.l.b16 %v101
    %v138 = vunpack.c.l.b16 %v102
    %v139 = vunpack.c.l.b16 %v103
    %v140 = vunpack.c.l.b16 %v104
    %v141 = vunpack.c.l.b16 %v105
    %v142 = vunpack.c.l.b16 %v106
    %v143 = vpack.c.b16 %v128, %v127
    %v144 = vpack.c.b16 %v130, %v129
    %v145 = vpack.c.b16 %v132, %v131
    %v146 = vpack.c.b16 %v134, %v133
    %v147 = vpack.c.b16 %v136, %v135
    %v148 = vpack.c.b16 %v138, %v137
    %v149 = vpack.c.b16 %v140, %v139
    %v150 = vpack.c.b16 %v142, %v141
    %159 = vmatpush.bf16.msra.mxu0 %v150
    %160 = vmatpush.bf16.msra.mxu0 %v149
    %161 = vmatpush.bf16.msra.mxu0 %v148
    %162 = vmatpush.bf16.msra.mxu0 %v147
    %163 = vmatpush.bf16.msra.mxu0 %v146
    %164 = vmatpush.bf16.msra.mxu0 %v145
    %165 = vmatpush.bf16.msra.mxu0 %v144
    %166 = vmatpush.bf16.msra.mxu0 %v143
    %167 = vmatmul.bf16.gmra.mxu0 %v108
    %v168 = vpop.f32.mrf.mxu0
    %v169 = vadd.f32 %v110, %v168
    %v170 = vpop.f32.mrf.mxu0
    %171 = vdwg.mxu0
    %v172 = vlaneseq
    %v173 = vand.u32 %v172, 127
    %vm174 = vcmp.lt.s32.totalorder %v173, 4
    %v175 = vsel %vm174, %v169, -inf
    %vm176 = vcmask 1041408
    %v177 = vsel %vm176, %v175, -inf
    %178 = vmax.xlane.f32.xlu0 %v177
    %v179 = vpop.xlane.xlu0 %178
    %v180 = vsub.f32 %v175, %v179
    %v181 = vmul.f32 %v180, 1.442695
    %v182 = vpow.pop %v181
    %v183 = vsel %vm176, %v182, 0.0
    %184 = vadd.xlane.f32.xlu0 %v183
    %v185 = vpop.xlane.xlu0 %184
    %v186 = vrcp.pop %v185
    %v187 = vmul.f32 %v185, %v186
    %v188 = vsub.f32 1.0, %v187
    %v189 = vmul.f32 %v186, %v188
    %v190 = vadd.f32 %v186, %v189
    %vm191 = vweird.f32 %v185
    %vm192 = vweird.f32 %v186
    %vm193 = vmor %vm191, %vm192
    %v194 = vsel %vm193, %v186, %v190
    %v195 = vand.u32 2147483647, %v185
    %vm196 = vcmp.eq.f32.partialorder %v195, 8.507059e+37
    %v197 = vand.u32 %v185, 2147483648
    %v198 = vor.u32 1.1754944e-38, %v197
    %v199 = vsel %vm196, %v198, %v194
    %v200 = vmul.f32 %v182, %v199
    %v201 = vsel %vm174, %v200, %v169
    %vm202 = vcmask 58368
    %203 = vst.msk [vmem:[#allocation8] sm:$0x3] %vm202, %v201
    // Predicated region
    $region26: #{tpu_custom_call.1} parent=1 // pred_check
      _
    $region27: #{tpu_custom_call.1} parent=1 // pred_check_branch
      %205 = sbr.rel (0) target = $region29
    $region28: #{tpu_custom_call.1} parent=1 // pred_region
      %207 = vsyncadd [#allocation4], 0
      %s209 = sshll.u32 [#allocation8], 4
      %s210 = int_to_ptr.vmem [resolvable:$true] %s209
      %s211 = sshll.u32 %s3, 4
      %s212 = int_to_ptr.hbm [resolvable:$true] %s211
      %214 = dma.vmem_to_hbm [thread:$0]  %s210, 32, %s212, [#allocation4]
    $region29: #{tpu_custom_call.1} parent=1 // pred_fallthru
      _
    // Predicated region
    $region30: #{tpu_custom_call.1} parent=1 // pred_check
      _
    $region31: #{tpu_custom_call.1} parent=1 // pred_check_branch
      %216 = sbr.rel (0) target = $region33
    $region32: #{tpu_custom_call.1} parent=1 // pred_region
      %218 = dma.done [#allocation4], 32
    $region33: #{tpu_custom_call.1} parent=1 // pred_fallthru
      _
    %219 = vsyncpa [#allocation3], 1
    %220 = vsyncpa [#allocation6], 1
    %221 = vsyncpa [#allocation4], 1

</llo_original>
